<compile_context>
chip_gen: v7x
topology: tpu7x:2x2x1
jax: 0.10.0
libtpu: 0.0.40
codegen_flags: <defaults>
</compile_context>

<pallas_src>
import functools

import jax
import jax.numpy as jnp
from jax.experimental import pallas as pl
from jax.experimental.pallas import tpu as pltpu  # noqa: F401  (TPU backend assumed)


def _round_up(n: int, m: int) -> int:
    return ((n + m - 1) // m) * m


def dqn_kernel(x_ref, w1_ref, b1_ref, w2_ref, b2_ref, w3_ref, b3_ref, o_ref):
    # MXU inputs cast to bf16 (native MXU type), accumulate in f32.
    # Bias add + ReLU stay f32 on the VPU (free under MXU slack; v5e has no bf16 VPU).
    x = x_ref[...]
    h1 = jnp.dot(x.astype(jnp.bfloat16), w1_ref[...],
                 preferred_element_type=jnp.float32)
    h1 = jnp.maximum(h1 + b1_ref[...], 0.0)
    h2 = jnp.dot(h1.astype(jnp.bfloat16), w2_ref[...],
                 preferred_element_type=jnp.float32)
    h2 = jnp.maximum(h2 + b2_ref[...], 0.0)
    out = jnp.dot(h2.astype(jnp.bfloat16), w3_ref[...],
                  preferred_element_type=jnp.float32)
    o_ref[...] = (out + b3_ref[...]).astype(o_ref.dtype)


@functools.partial(jax.jit, static_argnames=("out_dim",))
def dqn_forward(x, p, out_dim):
    """x: (B, input_dim) f32. p: padded params (bf16 weights, f32 biases).

    Returns (B, out_dim) f32 — identical to the PyTorch forward on the real
    (unpadded) slice.
    """
    B, in_dim = x.shape
    Bp = _round_up(max(B, 1), 8)          # sublane-aligned batch
    in_p = p["w1"].shape[0]               # padded input dim (16)
    out_p = p["w3"].shape[1]              # padded output dim (896 = 7*128)

    xp = jnp.zeros((Bp, in_p), jnp.float32).at[:B, :in_dim].set(x)

    full = lambda a: pl.BlockSpec(a.shape, lambda: (0,) * a.ndim)
    out_padded = pl.pallas_call(
        dqn_kernel,
        out_shape=jax.ShapeDtypeStruct((Bp, out_p), jnp.float32),
        grid=(),  # tiny problem: everything VMEM-resident, single invocation
        in_specs=[full(xp), full(p["w1"]), full(p["b1"]), full(p["w2"]),
                  full(p["b2"]), full(p["w3"]), full(p["b3"])],
        out_specs=pl.BlockSpec((Bp, out_p), lambda: (0, 0)),
    )(xp, p["w1"], p["b1"], p["w2"], p["b2"], p["w3"], p["b3"])
    # TODO(synk): for replay-batch sizes >= 256 on v7x, add a parallel batch
    # grid axis (dimension_semantics=("parallel",)) so both TensorCores share it.
    return out_padded[:B, :out_dim]


def init_dqn_params(key, input_dim, hidden, output_dim):
    """PyTorch nn.Linear-style init (uniform +/- 1/sqrt(fan_in)).

    Weights stored transposed vs. torch, i.e. (in_features, out_features).
    """
    ks = jax.random.split(key, 6)

    def linear(kw, kb, fan_in, fan_out):
        bound = 1.0 / jnp.sqrt(jnp.float32(fan_in))
        w = jax.random.uniform(kw, (fan_in, fan_out), jnp.float32, -bound, bound)
        b = jax.random.uniform(kb, (1, fan_out), jnp.float32, -bound, bound)
        return w, b

    w1, b1 = linear(ks[0], ks[1], input_dim, hidden)
    w2, b2 = linear(ks[2], ks[3], hidden, hidden)
    w3, b3 = linear(ks[4], ks[5], hidden, output_dim)
    return {"w1": w1, "b1": b1, "w2": w2, "b2": b2, "w3": w3, "b3": b3}


def pad_and_cast_params(p):
    """Zero-pad to TPU-friendly shapes and cast weights to bf16 (done once).

    Padded hidden units get zero weights AND zero biases (ReLU(0)=0) and padded
    w3 rows are zero, so padded lanes never leak into real outputs.
    """
    in_dim, hidden = p["w1"].shape
    out_dim = p["w3"].shape[1]
    Ipad = _round_up(in_dim, 8)       # 9  -> 16
    Hpad = _round_up(hidden, 128)     # 64 -> 128
    Opad = _round_up(out_dim, 128)    # 804 -> 896

    def pad2(a, r, c):
        return jnp.zeros((r, c), a.dtype).at[:a.shape[0], :a.shape[1]].set(a)

    return {
        "w1": pad2(p["w1"], Ipad, Hpad).astype(jnp.bfloat16),
        "b1": pad2(p["b1"], 1, Hpad),
        "w2": pad2(p["w2"], Hpad, Hpad).astype(jnp.bfloat16),
        "b2": pad2(p["b2"], 1, Hpad),
        "w3": pad2(p["w3"], Hpad, Opad).astype(jnp.bfloat16),
        "b3": pad2(p["b3"], 1, Opad),
    }


def dqn_reference(x, p, out_dim):
    """Pure-JAX reference with the same bf16-weight / f32-accumulate numerics."""
    in_p = p["w1"].shape[0]
    xp = jnp.zeros((x.shape[0], in_p), jnp.float32).at[:, :x.shape[1]].set(x)

    def mm(a, w):
        return jnp.dot(a.astype(jnp.bfloat16), w, preferred_element_type=jnp.float32)

    h1 = jnp.maximum(mm(xp, p["w1"]) + p["b1"], 0.0)
    h2 = jnp.maximum(mm(h1, p["w2"]) + p["b2"], 0.0)
    return (mm(h2, p["w3"]) + p["b3"])[:, :out_dim]


if __name__ == "__main__":
    num_stocks = 4
    input_dim = num_stocks * 2 + 1        # 9  = observation_space.shape[0]
    output_dim = num_stocks * 201         # 804 = sum(action_space.nvec)
    hidden = 64
    batch = 2

    key = jax.random.PRNGKey(0)
    k_params, k_x = jax.random.split(key)
    params = init_dqn_params(k_params, input_dim, hidden, output_dim)
    p_pad = pad_and_cast_params(params)
    x = jax.random.uniform(k_x, (batch, input_dim), jnp.float32, 0.0, 100.0)

    out = jax.block_until_ready(dqn_forward(x, p_pad, output_dim))
    ref = dqn_reference(x, p_pad, output_dim)

    assert out.shape == (batch, output_dim)
    assert jnp.allclose(out, ref, atol=1e-2, rtol=1e-3), float(
        jnp.max(jnp.abs(out - ref)))
    print("KERNEL_OK")
</pallas_src>

<mosaic_0001>
module attributes {stable_mosaic.version = 11 : i64} {
  func.func @dqn_kernel(%arg0: memref<8x16xf32, #tpu.memory_space<vmem>>, %arg1: memref<16x128xbf16, #tpu.memory_space<vmem>>, %arg2: memref<1x128xf32, #tpu.memory_space<vmem>>, %arg3: memref<128x128xbf16, #tpu.memory_space<vmem>>, %arg4: memref<1x128xf32, #tpu.memory_space<vmem>>, %arg5: memref<128x896xbf16, #tpu.memory_space<vmem>>, %arg6: memref<1x896xf32, #tpu.memory_space<vmem>>, %arg7: memref<8x896xf32, #tpu.memory_space<vmem>>) attributes {dimension_semantics = [], scalar_prefetch = 0 : i64, scratch_operands = 0 : i64, tpu.core_type = #tpu.core_type<tc>} {
    %c0 = arith.constant 0 : index
    %c0_0 = arith.constant 0 : index
    %0 = vector.load %arg0[%c0, %c0_0] : memref<8x16xf32, #tpu.memory_space<vmem>>, vector<8x16xf32>
    %1 = arith.truncf %0 : vector<8x16xf32> to vector<8x16xbf16>
    %c0_1 = arith.constant 0 : index
    %c0_2 = arith.constant 0 : index
    %2 = vector.load %arg1[%c0_1, %c0_2] : memref<16x128xbf16, #tpu.memory_space<vmem>>, vector<16x128xbf16>
    %cst = arith.constant dense<0.000000e+00> : vector<8x128xf32>
    %3 = tpu.matmul %1, %2, %cst {dimension_numbers = #tpu.dot_dimension_numbers<[1], [0], [0], [1], [0, 0, 1, 1], [], []>} : vector<8x16xbf16>, vector<16x128xbf16>, vector<8x128xf32> -> vector<8x128xf32>
    %c0_3 = arith.constant 0 : index
    %c0_4 = arith.constant 0 : index
    %4 = vector.load %arg2[%c0_3, %c0_4] : memref<1x128xf32, #tpu.memory_space<vmem>>, vector<1x128xf32>
    %5 = vector.broadcast %4 : vector<1x128xf32> to vector<8x128xf32>
    %6 = arith.addf %3, %5 : vector<8x128xf32>
    %cst_5 = arith.constant 0.000000e+00 : f32
    %7 = vector.broadcast %cst_5 : f32 to vector<8x128xf32>
    %8 = arith.maximumf %6, %7 : vector<8x128xf32>
    %9 = arith.truncf %8 : vector<8x128xf32> to vector<8x128xbf16>
    %c0_6 = arith.constant 0 : index
    %c0_7 = arith.constant 0 : index
    %10 = vector.load %arg3[%c0_6, %c0_7] : memref<128x128xbf16, #tpu.memory_space<vmem>>, vector<128x128xbf16>
    %cst_8 = arith.constant dense<0.000000e+00> : vector<8x128xf32>
    %11 = tpu.matmul %9, %10, %cst_8 {dimension_numbers = #tpu.dot_dimension_numbers<[1], [0], [0], [1], [0, 0, 1, 1], [], []>} : vector<8x128xbf16>, vector<128x128xbf16>, vector<8x128xf32> -> vector<8x128xf32>
    %c0_9 = arith.constant 0 : index
    %c0_10 = arith.constant 0 : index
    %12 = vector.load %arg4[%c0_9, %c0_10] : memref<1x128xf32, #tpu.memory_space<vmem>>, vector<1x128xf32>
    %13 = vector.broadcast %12 : vector<1x128xf32> to vector<8x128xf32>
    %14 = arith.addf %11, %13 : vector<8x128xf32>
    %cst_11 = arith.constant 0.000000e+00 : f32
    %15 = vector.broadcast %cst_11 : f32 to vector<8x128xf32>
    %16 = arith.maximumf %14, %15 : vector<8x128xf32>
    %17 = arith.truncf %16 : vector<8x128xf32> to vector<8x128xbf16>
    %c0_12 = arith.constant 0 : index
    %c0_13 = arith.constant 0 : index
    %18 = vector.load %arg5[%c0_12, %c0_13] : memref<128x896xbf16, #tpu.memory_space<vmem>>, vector<128x896xbf16>
    %cst_14 = arith.constant dense<0.000000e+00> : vector<8x896xf32>
    %19 = tpu.matmul %17, %18, %cst_14 {dimension_numbers = #tpu.dot_dimension_numbers<[1], [0], [0], [1], [0, 0, 1, 1], [], []>} : vector<8x128xbf16>, vector<128x896xbf16>, vector<8x896xf32> -> vector<8x896xf32>
    %c0_15 = arith.constant 0 : index
    %c0_16 = arith.constant 0 : index
    %20 = vector.load %arg6[%c0_15, %c0_16] : memref<1x896xf32, #tpu.memory_space<vmem>>, vector<1x896xf32>
    %21 = vector.broadcast %20 : vector<1x896xf32> to vector<8x896xf32>
    %22 = arith.addf %19, %21 : vector<8x896xf32>
    %c0_17 = arith.constant 0 : index
    %c0_18 = arith.constant 0 : index
    %23 = vector.load %arg7[%c0_17, %c0_18] : memref<8x896xf32, #tpu.memory_space<vmem>>, vector<8x896xf32>
    tpu.vector_store %arg7[%c0_17, %c0_18], %22 {strides = array<i32>} : memref<8x896xf32, #tpu.memory_space<vmem>>, vector<8x896xf32>,
    return
  }
}

</mosaic_0001>

<llo_original>
// kernel: dqn_forward.1
$region0: #{dqn_forward.1}
  #allocation0 [shape = 'u32[]', space=smem, size = 0x4, offset = 0x4, fixed_abs, tag = 'smem constant byte address 0x4 - core index']
  #allocation1 [shape = 'u32[144,128]{1,0:T(1,128)}', space=vmem, size = 0x12000, scoped, tag = 'internal scratch']
  %s0 = inlined_call_operand.vmem [shape: f32[8,16], index: 0, kind: input, shape index: {}]
  %s1 = inlined_call_operand.vmem [shape: bf16[16,128], index: 1, kind: input, shape index: {}]
  %s2 = inlined_call_operand.vmem [shape: f32[1,128], index: 2, kind: input, shape index: {}]
  %s3 = inlined_call_operand.hbm [shape: bf16[128,128], index: 3, kind: input, shape index: {}]
  %s4 = inlined_call_operand.vmem [shape: f32[1,128], index: 4, kind: input, shape index: {}]
  %s5 = inlined_call_operand.hbm [shape: bf16[128,896], index: 5, kind: input, shape index: {}]
  %s6 = inlined_call_operand.vmem [shape: f32[1,896], index: 6, kind: input, shape index: {}]
  %s7 = inlined_call_operand.vmem [shape: f32[8,896], index: 7, kind: output, shape index: {}]
  %s8 = sld [smem:[#allocation0]]
  $region46: #{dqn_forward.1} parent=0
    _
  %s10 = ssub.s32 1, %s8
  %s11 = scalar_select 0, %s10, %s8
  $region1: #{dqn_forward.1} parent=0
    #allocation2 [shape = 'u8[32768]{0}', space=vmem, size = 0x8000, scoped, tag = 'input window, operand 3, single buffered']
    #allocation3 [shape = 's32[1]{0}', space=sflag, size = 0x4, scoped, tag = 'scoped memory for dqn_forward.1']
    #allocation4 [shape = 'u8[229376]{0}', space=vmem, size = 0x38000, scoped, tag = 'input window, operand 5, single buffered']
    #allocation5 [shape = 's32[1]{0}', space=sflag, size = 0x4, scoped, tag = 'scoped memory for dqn_forward.1']
    %12 = vsyncpa [#allocation3], 0
    %13 = vsyncpa [#allocation5], 0
    // Predicated region
    $region2: #{dqn_forward.1} parent=1 // pred_check
      _
    $region3: #{dqn_forward.1} parent=1 // pred_check_branch
      %15 = sbr.rel (0) target = $region5
    $region4: #{dqn_forward.1} parent=1 // pred_region
      _
    $region5: #{dqn_forward.1} parent=1 // pred_fallthru
      _
    // Predicated region
    $region6: #{dqn_forward.1} parent=1 // pred_check
      _
    $region7: #{dqn_forward.1} parent=1 // pred_check_branch
      %17 = sbr.rel (0) target = $region9
    $region8: #{dqn_forward.1} parent=1 // pred_region
      _
    $region9: #{dqn_forward.1} parent=1 // pred_fallthru
      _
    // Predicated region
    $region10: #{dqn_forward.1} parent=1 // pred_check
      _
    $region11: #{dqn_forward.1} parent=1 // pred_check_branch
      %19 = sbr.rel (0) target = $region13
    $region12: #{dqn_forward.1} parent=1 // pred_region
      _
    $region13: #{dqn_forward.1} parent=1 // pred_fallthru
      _
    // Predicated region
    $region14: #{dqn_forward.1} parent=1 // pred_check
      _
    $region15: #{dqn_forward.1} parent=1 // pred_check_branch
      %21 = sbr.rel (0) target = $region17
    $region16: #{dqn_forward.1} parent=1 // pred_region
      %s23 = ssub.s32 1024, 1024
      %24 = vsyncadd [#allocation3], %s23
      %s25 = sshll.u32 [#allocation2], 4
      %s26 = int_to_ptr.vmem [resolvable:$true] %s25
      %31 = dma.hbm_to_vmem [thread:$0]  %s3, 1024, %s26, [#allocation3], 64, 64, 4
    $region17: #{dqn_forward.1} parent=1 // pred_fallthru
      _
    // Predicated region
    $region18: #{dqn_forward.1} parent=1 // pred_check
      _
    $region19: #{dqn_forward.1} parent=1 // pred_check_branch
      %33 = sbr.rel (0) target = $region21
    $region20: #{dqn_forward.1} parent=1 // pred_region
      _
    $region21: #{dqn_forward.1} parent=1 // pred_fallthru
      _
    // Predicated region
    $region22: #{dqn_forward.1} parent=1 // pred_check
      _
    $region23: #{dqn_forward.1} parent=1 // pred_check_branch
      %35 = sbr.rel (0) target = $region25
    $region24: #{dqn_forward.1} parent=1 // pred_region
      %s37 = ssub.s32 7168, 7168
      %38 = vsyncadd [#allocation5], %s37
      %s39 = sshll.u32 [#allocation4], 4
      %s40 = int_to_ptr.vmem [resolvable:$true] %s39
      %45 = dma.hbm_to_vmem [thread:$0]  %s5, 7168, %s40, [#allocation5], 448, 448, 28
    $region25: #{dqn_forward.1} parent=1 // pred_fallthru
      _
    // Predicated region
    $region26: #{dqn_forward.1} parent=1 // pred_check
      _
    $region27: #{dqn_forward.1} parent=1 // pred_check_branch
      %47 = sbr.rel (0) target = $region29
    $region28: #{dqn_forward.1} parent=1 // pred_region
      _
    $region29: #{dqn_forward.1} parent=1 // pred_fallthru
      _
    // Predicated region
    $region30: #{dqn_forward.1} parent=1 // pred_check
      _
    $region31: #{dqn_forward.1} parent=1 // pred_check_branch
      %49 = sbr.rel (0) target = $region33
    $region32: #{dqn_forward.1} parent=1 // pred_region
      %50 = dma.done [#allocation3], 1024
    $region33: #{dqn_forward.1} parent=1 // pred_fallthru
      _
    // Predicated region
    $region34: #{dqn_forward.1} parent=1 // pred_check
      _
    $region35: #{dqn_forward.1} parent=1 // pred_check_branch
      %52 = sbr.rel (0) target = $region37
    $region36: #{dqn_forward.1} parent=1 // pred_region
      %53 = dma.done [#allocation5], 7168
    $region37: #{dqn_forward.1} parent=1 // pred_fallthru
      _
    %v55 = vld [vmem:[%s0] sm:$0xff]
    %v56 = vpack.c.bf16 %v55, %v55
    %v57 = vld [vmem:[%s1] sm:$0xf]
    %v58 = vld [vmem:[%s1 + $0x4] sm:$0xf]
    %v59 = vld [vmem:[%s2] sm:$0x1]
    %v61 = vlaneseq
    %v62 = vshrl.u32 %v61, 7
    %v63 = vsub.s32 0, %v62
    %v64 = vrot.slane %v59, %v63
    %v68 = vunpack.c.l.b16 %v57
    %v69 = vunpack.c.l.b16 %v58
    %v70 = vpack.c.b16 %v69, %v68
    %vm72 = vcmask 130048
    %v74 = vsel %vm72, %v56, 0
    %76 = vmatprep.subr.bf16.mxu0 0
    %77 = vmatpush1.bf16.msra.mxu0 %v70
    %78 = vmatprep.subr.bf16.mxu0 0
    %79 = vmatpush1.bf16.msra.mxu0 0
    %80 = vmatprep.subr.bf16.mxu0 0
    %81 = vmatpush1.bf16.msra.mxu0 0
    %82 = vmatprep.subr.bf16.mxu0 0
    %83 = vmatpush1.bf16.msra.mxu0 0
    %84 = vmatprep.subr.bf16.mxu0 0
    %85 = vmatpush1.bf16.msra.mxu0 0
    %86 = vmatprep.subr.bf16.mxu0 0
    %87 = vmatpush1.bf16.msra.mxu0 0
    %88 = vmatprep.subr.bf16.mxu0 0
    %89 = vmatpush1.bf16.msra.mxu0 0
    %90 = vmatprep.subr.bf16.mxu0 0
    %91 = vmatpush1.bf16.msra.mxu0 0
    %92 = vmatprep.subr.bf16.mxu0 0
    %93 = vmatpush1.bf16.msra.mxu0 0
    %94 = vmatprep.subr.bf16.mxu0 0
    %95 = vmatpush1.bf16.msra.mxu0 0
    %96 = vmatprep.subr.bf16.mxu0 0
    %97 = vmatpush1.bf16.msra.mxu0 0
    %98 = vmatprep.subr.bf16.mxu0 0
    %99 = vmatpush1.bf16.msra.mxu0 0
    %100 = vmatprep.subr.bf16.mxu0 0
    %101 = vmatpush1.bf16.msra.mxu0 0
    %102 = vmatprep.subr.bf16.mxu0 0
    %103 = vmatpush1.bf16.msra.mxu0 0
    %104 = vmatprep.subr.bf16.mxu0 0
    %105 = vmatpush1.bf16.msra.mxu0 0
    %106 = vmatprep.subr.bf16.mxu0 0
    %107 = vmatpush1.bf16.msra.mxu0 0
    %108 = vmatprep.mubr.bf16.mxu0 0
    %109 = vmatmul.mubr.bf16.gmra.mrb[0].mxu0 %v74
    %v110 = vpop.f32.mrb[0].mxu0
    %v111 = vadd.f32 %v64, %v110
    %v112 = vpop.f32.mrb[0].mxu0
    %v113 = vpop.f32.mrb[0].mxu0
    %v114 = vpop.f32.mrb[0].mxu0
    %115 = vdwg.mxu0
    %v116 = vmax.f32 %v111, 0.0
    %v117 = vpack.c.bf16 %v116, %v116
    %v118 = vld [vmem:[#allocation2] sm:$0xf]
    %v119 = vld [vmem:[#allocation2 + $0x4] sm:$0xf]
    %v120 = vld [vmem:[#allocation2 + $0x8] sm:$0xf]
    %v121 = vld [vmem:[#allocation2 + $0xc] sm:$0xf]
    %v122 = vld [vmem:[#allocation2 + $0x10] sm:$0xf]
    %v123 = vld [vmem:[#allocation2 + $0x14] sm:$0xf]
    %v124 = vld [vmem:[#allocation2 + $0x18] sm:$0xf]
    %v125 = vld [vmem:[#allocation2 + $0x1c] sm:$0xf]
    %v126 = vld [vmem:[#allocation2 + $0x20] sm:$0xf]
    %v127 = vld [vmem:[#allocation2 + $0x24] sm:$0xf]
    %v128 = vld [vmem:[#allocation2 + $0x28] sm:$0xf]
    %v129 = vld [vmem:[#allocation2 + $0x2c] sm:$0xf]
    %v130 = vld [vmem:[#allocation2 + $0x30] sm:$0xf]
    %v131 = vld [vmem:[#allocation2 + $0x34] sm:$0xf]
    %v132 = vld [vmem:[#allocation2 + $0x38] sm:$0xf]
    %v133 = vld [vmem:[#allocation2 + $0x3c] sm:$0xf]
    %v134 = vld [vmem:[%s4] sm:$0x1]
    %v136 = vlaneseq
    %v137 = vshrl.u32 %v136, 7
    %v138 = vsub.s32 0, %v137
    %v139 = vrot.slane %v134, %v138
    %v157 = vunpack.c.l.b16 %v118
    %v158 = vunpack.c.l.b16 %v119
    %v159 = vunpack.c.l.b16 %v120
    %v160 = vunpack.c.l.b16 %v121
    %v161 = vunpack.c.l.b16 %v122
    %v162 = vunpack.c.l.b16 %v123
    %v163 = vunpack.c.l.b16 %v124
    %v164 = vunpack.c.l.b16 %v125
    %v165 = vunpack.c.l.b16 %v126
    %v166 = vunpack.c.l.b16 %v127
    %v167 = vunpack.c.l.b16 %v128
    %v168 = vunpack.c.l.b16 %v129
    %v169 = vunpack.c.l.b16 %v130
    %v170 = vunpack.c.l.b16 %v131
    %v171 = vunpack.c.l.b16 %v132
    %v172 = vunpack.c.l.b16 %v133
    %v173 = vpack.c.b16 %v158, %v157
    %v174 = vpack.c.b16 %v160, %v159
    %v175 = vpack.c.b16 %v162, %v161
    %v176 = vpack.c.b16 %v164, %v163
    %v177 = vpack.c.b16 %v166, %v165
    %v178 = vpack.c.b16 %v168, %v167
    %v179 = vpack.c.b16 %v170, %v169
    %v180 = vpack.c.b16 %v172, %v171
    %189 = vmatprep.subr.bf16.mxu0 0
    %190 = vmatpush1.bf16.msra.mxu0 %v173
    %191 = vmatprep.subr.bf16.mxu0 0
    %192 = vmatpush1.bf16.msra.mxu0 %v174
    %193 = vmatprep.subr.bf16.mxu0 0
    %194 = vmatpush1.bf16.msra.mxu0 %v175
    %195 = vmatprep.subr.bf16.mxu0 0
    %196 = vmatpush1.bf16.msra.mxu0 %v176
    %197 = vmatprep.subr.bf16.mxu0 0
    %198 = vmatpush1.bf16.msra.mxu0 %v177
    %199 = vmatprep.subr.bf16.mxu0 0
    %200 = vmatpush1.bf16.msra.mxu0 %v178
    %201 = vmatprep.subr.bf16.mxu0 0
    %202 = vmatpush1.bf16.msra.mxu0 %v179
    %203 = vmatprep.subr.bf16.mxu0 0
    %204 = vmatpush1.bf16.msra.mxu0 %v180
    %205 = vmatprep.subr.bf16.mxu0 0
    %206 = vmatpush1.bf16.msra.mxu0 0
    %207 = vmatprep.subr.bf16.mxu0 0
    %208 = vmatpush1.bf16.msra.mxu0 0
    %209 = vmatprep.subr.bf16.mxu0 0
    %210 = vmatpush1.bf16.msra.mxu0 0
    %211 = vmatprep.subr.bf16.mxu0 0
    %212 = vmatpush1.bf16.msra.mxu0 0
    %213 = vmatprep.subr.bf16.mxu0 0
    %214 = vmatpush1.bf16.msra.mxu0 0
    %215 = vmatprep.subr.bf16.mxu0 0
    %216 = vmatpush1.bf16.msra.mxu0 0
    %217 = vmatprep.subr.bf16.mxu0 0
    %218 = vmatpush1.bf16.msra.mxu0 0
    %219 = vmatprep.subr.bf16.mxu0 0
    %220 = vmatpush1.bf16.msra.mxu0 0
    %221 = vmatprep.mubr.bf16.mxu0 0
    %222 = vmatmul.mubr.bf16.gmra.mrb[0].mxu0 %v117
    %v223 = vpop.f32.mrb[0].mxu0
    %v224 = vadd.f32 %v139, %v223
    %v225 = vpop.f32.mrb[0].mxu0
    %v226 = vpop.f32.mrb[0].mxu0
    %v227 = vpop.f32.mrb[0].mxu0
    %228 = vdwg.mxu0
    %v229 = vmax.f32 %v224, 0.0
    %v230 = vpack.c.bf16 %v229, %v229
    %v231 = vld [vmem:[#allocation4] sm:$0xff]
    %v232 = vld [vmem:[#allocation4 + $0x8] sm:$0xff]
    %v233 = vld [vmem:[#allocation4 + $0x10] sm:$0xff]
    %v234 = vld [vmem:[#allocation4 + $0x18] sm:$0xf]
    %v235 = vld [vmem:[#allocation4 + $0x1c] sm:$0xff]
    %v236 = vld [vmem:[#allocation4 + $0x24] sm:$0xff]
    %v237 = vld [vmem:[#allocation4 + $0x2c] sm:$0xff]
    %v238 = vld [vmem:[#allocation4 + $0x34] sm:$0xf]
    %v239 = vld [vmem:[#allocation4 + $0x38] sm:$0xff]
    %v240 = vld [vmem:[#allocation4 + $0x40] sm:$0xff]
    %v241 = vld [vmem:[#allocation4 + $0x48] sm:$0xff]
    %v242 = vld [vmem:[#allocation4 + $0x50] sm:$0xf]
    %v243 = vld [vmem:[#allocation4 + $0x54] sm:$0xff]
    %v244 = vld [vmem:[#allocation4 + $0x5c] sm:$0xff]
    %v245 = vld [vmem:[#allocation4 + $0x64] sm:$0xff]
    %v246 = vld [vmem:[#allocation4 + $0x6c] sm:$0xf]
    %v247 = vld [vmem:[#allocation4 + $0x70] sm:$0xff]
    %v248 = vld [vmem:[#allocation4 + $0x78] sm:$0xff]
    %v249 = vld [vmem:[#allocation4 + $0x80] sm:$0xff]
    %v250 = vld [vmem:[#allocation4 + $0x88] sm:$0xf]
    %v251 = vld [vmem:[#allocation4 + $0x8c] sm:$0xff]
    %v252 = vld [vmem:[#allocation4 + $0x94] sm:$0xff]
    %v253 = vld [vmem:[#allocation4 + $0x9c] sm:$0xff]
    %v254 = vld [vmem:[#allocation4 + $0xa4] sm:$0xf]
    %v255 = vld [vmem:[#allocation4 + $0xa8] sm:$0xff]
    %v256 = vld [vmem:[#allocation4 + $0xb0] sm:$0xff]
    %v257 = vld [vmem:[#allocation4 + $0xb8] sm:$0xff]
    %v258 = vld [vmem:[#allocation4 + $0xc0] sm:$0xf]
    %v259 = vld [vmem:[#allocation4 + $0xc4] sm:$0xff]
    %v260 = vld [vmem:[#allocation4 + $0xcc] sm:$0xff]
    %v261 = vld [vmem:[#allocation4 + $0xd4] sm:$0xff]
    %v262 = vld [vmem:[#allocation4 + $0xdc] sm:$0xf]
    %v263 = vld [vmem:[#allocation4 + $0xe0] sm:$0xff]
    %v264 = vld [vmem:[#allocation4 + $0xe8] sm:$0xff]
    %v265 = vld [vmem:[#allocation4 + $0xf0] sm:$0xff]
    %v266 = vld [vmem:[#allocation4 + $0xf8] sm:$0xf]
    %v267 = vld [vmem:[#allocation4 + $0xfc] sm:$0xff]
    %v268 = vld [vmem:[#allocation4 + $0x104] sm:$0xff]
    %v269 = vld [vmem:[#allocation4 + $0x10c] sm:$0xff]
    %v270 = vld [vmem:[#allocation4 + $0x114] sm:$0xf]
    %v271 = vld [vmem:[#allocation4 + $0x118] sm:$0xff]
    %v272 = vld [vmem:[#allocation4 + $0x120] sm:$0xff]
    %v273 = vld [vmem:[#allocation4 + $0x128] sm:$0xff]
    %v274 = vld [vmem:[#allocation4 + $0x130] sm:$0xf]
    %v275 = vld [vmem:[#allocation4 + $0x134] sm:$0xff]
    %v276 = vld [vmem:[#allocation4 + $0x13c] sm:$0xff]
    %v277 = vld [vmem:[#allocation4 + $0x144] sm:$0xff]
    %v278 = vld [vmem:[#allocation4 + $0x14c] sm:$0xf]
    %v279 = vld [vmem:[#allocation4 + $0x150] sm:$0xff]
    %v280 = vld [vmem:[#allocation4 + $0x158] sm:$0xff]
    %v281 = vld [vmem:[#allocation4 + $0x160] sm:$0xff]
    %v282 = vld [vmem:[#allocation4 + $0x168] sm:$0xf]
    %v283 = vld [vmem:[#allocation4 + $0x16c] sm:$0xff]
    %v284 = vld [vmem:[#allocation4 + $0x174] sm:$0xff]
    %v285 = vld [vmem:[#allocation4 + $0x17c] sm:$0xff]
    %v286 = vld [vmem:[#allocation4 + $0x184] sm:$0xf]
    %v287 = vld [vmem:[#allocation4 + $0x188] sm:$0xff]
    %v288 = vld [vmem:[#allocation4 + $0x190] sm:$0xff]
    %v289 = vld [vmem:[#allocation4 + $0x198] sm:$0xff]
    %v290 = vld [vmem:[#allocation4 + $0x1a0] sm:$0xf]
    %v291 = vld [vmem:[#allocation4 + $0x1a4] sm:$0xff]
    %v292 = vld [vmem:[#allocation4 + $0x1ac] sm:$0xff]
    %v293 = vld [vmem:[#allocation4 + $0x1b4] sm:$0xff]
    %v294 = vld [vmem:[#allocation4 + $0x1bc] sm:$0xf]
    %v295 = vld [vmem:[%s6] sm:$0xff]
    %v297 = vlaneseq
    %v298 = vshrl.u32 %v297, 7
    %v299 = vsub.s32 0, %v298
    %v300 = vrot.slane %v295, %v299
    %v301 = vlaneseq
    %v302 = vshrl.u32 %v301, 7
    %v303 = vsub.s32 1, %v302
    %v304 = vrot.slane %v295, %v303
    %v305 = vlaneseq
    %v306 = vshrl.u32 %v305, 7
    %v307 = vsub.s32 2, %v306
    %v308 = vrot.slane %v295, %v307
    %v309 = vlaneseq
    %v310 = vshrl.u32 %v309, 7
    %v311 = vsub.s32 3, %v310
    %v312 = vrot.slane %v295, %v311
    %v313 = vlaneseq
    %v314 = vshrl.u32 %v313, 7
    %v315 = vsub.s32 4, %v314
    %v316 = vrot.slane %v295, %v315
    %v317 = vlaneseq
    %v318 = vshrl.u32 %v317, 7
    %v319 = vsub.s32 5, %v318
    %v320 = vrot.slane %v295, %v319
    %v321 = vlaneseq
    %v322 = vshrl.u32 %v321, 7
    %v323 = vsub.s32 6, %v322
    %v324 = vrot.slane %v295, %v323
    %v396 = vunpack.c.l.b16 %v231
    %v397 = vunpack.c.h.b16 %v231
    %v398 = vunpack.c.l.b16 %v232
    %v399 = vunpack.c.h.b16 %v232
    %v400 = vunpack.c.l.b16 %v233
    %v401 = vunpack.c.h.b16 %v233
    %v402 = vunpack.c.l.b16 %v234
    %v403 = vunpack.c.l.b16 %v235
    %v404 = vunpack.c.h.b16 %v235
    %v405 = vunpack.c.l.b16 %v236
    %v406 = vunpack.c.h.b16 %v236
    %v407 = vunpack.c.l.b16 %v237
    %v408 = vunpack.c.h.b16 %v237
    %v409 = vunpack.c.l.b16 %v238
    %v410 = vunpack.c.l.b16 %v239
    %v411 = vunpack.c.h.b16 %v239
    %v412 = vunpack.c.l.b16 %v240
    %v413 = vunpack.c.h.b16 %v240
    %v414 = vunpack.c.l.b16 %v241
    %v415 = vunpack.c.h.b16 %v241
    %v416 = vunpack.c.l.b16 %v242
    %v417 = vunpack.c.l.b16 %v243
    %v418 = vunpack.c.h.b16 %v243
    %v419 = vunpack.c.l.b16 %v244
    %v420 = vunpack.c.h.b16 %v244
    %v421 = vunpack.c.l.b16 %v245
    %v422 = vunpack.c.h.b16 %v245
    %v423 = vunpack.c.l.b16 %v246
    %v424 = vunpack.c.l.b16 %v247
    %v425 = vunpack.c.h.b16 %v247
    %v426 = vunpack.c.l.b16 %v248
    %v427 = vunpack.c.h.b16 %v248
    %v428 = vunpack.c.l.b16 %v249
    %v429 = vunpack.c.h.b16 %v249
    %v430 = vunpack.c.l.b16 %v250
    %v431 = vunpack.c.l.b16 %v251
    %v432 = vunpack.c.h.b16 %v251
    %v433 = vunpack.c.l.b16 %v252
    %v434 = vunpack.c.h.b16 %v252
    %v435 = vunpack.c.l.b16 %v253
    %v436 = vunpack.c.h.b16 %v253
    %v437 = vunpack.c.l.b16 %v254
    %v438 = vunpack.c.l.b16 %v255
    %v439 = vunpack.c.h.b16 %v255
    %v440 = vunpack.c.l.b16 %v256
    %v441 = vunpack.c.h.b16 %v256
    %v442 = vunpack.c.l.b16 %v257
    %v443 = vunpack.c.h.b16 %v257
    %v444 = vunpack.c.l.b16 %v258
    %v445 = vunpack.c.l.b16 %v259
    %v446 = vunpack.c.h.b16 %v259
    %v447 = vunpack.c.l.b16 %v260
    %v448 = vunpack.c.h.b16 %v260
    %v449 = vunpack.c.l.b16 %v261
    %v450 = vunpack.c.h.b16 %v261
    %v451 = vunpack.c.l.b16 %v262
    %v452 = vunpack.c.l.b16 %v263
    %v453 = vunpack.c.h.b16 %v263
    %v454 = vunpack.c.l.b16 %v264
    %v455 = vunpack.c.h.b16 %v264
    %v456 = vunpack.c.l.b16 %v265
    %v457 = vunpack.c.h.b16 %v265
    %v458 = vunpack.c.l.b16 %v266
    %v459 = vunpack.c.l.b16 %v267
    %v460 = vunpack.c.h.b16 %v267
    %v461 = vunpack.c.l.b16 %v268
    %v462 = vunpack.c.h.b16 %v268
    %v463 = vunpack.c.l.b16 %v269
    %v464 = vunpack.c.h.b16 %v269
    %v465 = vunpack.c.l.b16 %v270
    %v466 = vunpack.c.l.b16 %v271
    %v467 = vunpack.c.h.b16 %v271
    %v468 = vunpack.c.l.b16 %v272
    %v469 = vunpack.c.h.b16 %v272
    %v470 = vunpack.c.l.b16 %v273
    %v471 = vunpack.c.h.b16 %v273
    %v472 = vunpack.c.l.b16 %v274
    %v473 = vunpack.c.l.b16 %v275
    %v474 = vunpack.c.h.b16 %v275
    %v475 = vunpack.c.l.b16 %v276
    %v476 = vunpack.c.h.b16 %v276
    %v477 = vunpack.c.l.b16 %v277
    %v478 = vunpack.c.h.b16 %v277
    %v479 = vunpack.c.l.b16 %v278
    %v480 = vunpack.c.l.b16 %v279
    %v481 = vunpack.c.h.b16 %v279
    %v482 = vunpack.c.l.b16 %v280
    %v483 = vunpack.c.h.b16 %v280
    %v484 = vunpack.c.l.b16 %v281
    %v485 = vunpack.c.h.b16 %v281
    %v486 = vunpack.c.l.b16 %v282
    %v487 = vunpack.c.l.b16 %v283
    %v488 = vunpack.c.h.b16 %v283
    %v489 = vunpack.c.l.b16 %v284
    %v490 = vunpack.c.h.b16 %v284
    %v491 = vunpack.c.l.b16 %v285
    %v492 = vunpack.c.h.b16 %v285
    %v493 = vunpack.c.l.b16 %v286
    %v494 = vunpack.c.l.b16 %v287
    %v495 = vunpack.c.h.b16 %v287
    %v496 = vunpack.c.l.b16 %v288
    %v497 = vunpack.c.h.b16 %v288
    %v498 = vunpack.c.l.b16 %v289
    %v499 = vunpack.c.h.b16 %v289
    %v500 = vunpack.c.l.b16 %v290
    %v501 = vunpack.c.l.b16 %v291
    %v502 = vunpack.c.h.b16 %v291
    %v503 = vunpack.c.l.b16 %v292
    %v504 = vunpack.c.h.b16 %v292
    %v505 = vunpack.c.l.b16 %v293
    %v506 = vunpack.c.h.b16 %v293
    %v507 = vunpack.c.l.b16 %v294
    %v508 = vpack.c.b16 %v403, %v396
    %v509 = vpack.c.b16 %v404, %v397
    %v510 = vpack.c.b16 %v405, %v398
    %v511 = vpack.c.b16 %v406, %v399
    %v512 = vpack.c.b16 %v407, %v400
    %v513 = vpack.c.b16 %v408, %v401
    %v514 = vpack.c.b16 %v409, %v402
    %v515 = vpack.c.b16 %v417, %v410
    %v516 = vpack.c.b16 %v418, %v411
    %v517 = vpack.c.b16 %v419, %v412
    %v518 = vpack.c.b16 %v420, %v413
    %v519 = vpack.c.b16 %v421, %v414
    %v520 = vpack.c.b16 %v422, %v415
    %v521 = vpack.c.b16 %v423, %v416
    %v522 = vpack.c.b16 %v431, %v424
    %v523 = vpack.c.b16 %v432, %v425
    %v524 = vpack.c.b16 %v433, %v426
    %v525 = vpack.c.b16 %v434, %v427
    %v526 = vpack.c.b16 %v435, %v428
    %v527 = vpack.c.b16 %v436, %v429
    %v528 = vpack.c.b16 %v437, %v430
    %v529 = vpack.c.b16 %v445, %v438
    %v530 = vpack.c.b16 %v446, %v439
    %v531 = vpack.c.b16 %v447, %v440
    %v532 = vpack.c.b16 %v448, %v441
    %v533 = vpack.c.b16 %v449, %v442
    %v534 = vpack.c.b16 %v450, %v443
    %v535 = vpack.c.b16 %v451, %v444
    %v536 = vpack.c.b16 %v459, %v452
    %v537 = vpack.c.b16 %v460, %v453
    %v538 = vpack.c.b16 %v461, %v454
    %v539 = vpack.c.b16 %v462, %v455
    %v540 = vpack.c.b16 %v463, %v456
    %v541 = vpack.c.b16 %v464, %v457
    %v542 = vpack.c.b16 %v465, %v458
    %v543 = vpack.c.b16 %v473, %v466
    %v544 = vpack.c.b16 %v474, %v467
    %v545 = vpack.c.b16 %v475, %v468
    %v546 = vpack.c.b16 %v476, %v469
    %v547 = vpack.c.b16 %v477, %v470
    %v548 = vpack.c.b16 %v478, %v471
    %v549 = vpack.c.b16 %v479, %v472
    %v550 = vpack.c.b16 %v487, %v480
    %v551 = vpack.c.b16 %v488, %v481
    %v552 = vpack.c.b16 %v489, %v482
    %v553 = vpack.c.b16 %v490, %v483
    %v554 = vpack.c.b16 %v491, %v484
    %v555 = vpack.c.b16 %v492, %v485
    %v556 = vpack.c.b16 %v493, %v486
    %v557 = vpack.c.b16 %v501, %v494
    %v558 = vpack.c.b16 %v502, %v495
    %v559 = vpack.c.b16 %v503, %v496
    %v560 = vpack.c.b16 %v504, %v497
    %v561 = vpack.c.b16 %v505, %v498
    %v562 = vpack.c.b16 %v506, %v499
    %v563 = vpack.c.b16 %v507, %v500
    %620 = vmatprep.subr.bf16.mxu0 %v509
    %621 = vmatpush1.bf16.msra.mxu0 %v508
    %622 = vmatprep.subr.bf16.mxu0 %v516
    %623 = vmatpush1.bf16.msra.mxu0 %v515
    %624 = vmatprep.subr.bf16.mxu0 %v523
    %625 = vmatpush1.bf16.msra.mxu0 %v522
    %626 = vmatprep.subr.bf16.mxu0 %v530
    %627 = vmatpush1.bf16.msra.mxu0 %v529
    %628 = vmatprep.subr.bf16.mxu0 %v537
    %629 = vmatpush1.bf16.msra.mxu0 %v536
    %630 = vmatprep.subr.bf16.mxu0 %v544
    %631 = vmatpush1.bf16.msra.mxu0 %v543
    %632 = vmatprep.subr.bf16.mxu0 %v551
    %633 = vmatpush1.bf16.msra.mxu0 %v550
    %634 = vmatprep.subr.bf16.mxu0 %v558
    %635 = vmatpush1.bf16.msra.mxu0 %v557
    %636 = vmatprep.subr.bf16.mxu0 0
    %637 = vmatpush1.bf16.msra.mxu0 0
    %638 = vmatprep.subr.bf16.mxu0 0
    %639 = vmatpush1.bf16.msra.mxu0 0
    %640 = vmatprep.subr.bf16.mxu0 0
    %641 = vmatpush1.bf16.msra.mxu0 0
    %642 = vmatprep.subr.bf16.mxu0 0
    %643 = vmatpush1.bf16.msra.mxu0 0
    %644 = vmatprep.subr.bf16.mxu0 0
    %645 = vmatpush1.bf16.msra.mxu0 0
    %646 = vmatprep.subr.bf16.mxu0 0
    %647 = vmatpush1.bf16.msra.mxu0 0
    %648 = vmatprep.subr.bf16.mxu0 0
    %649 = vmatpush1.bf16.msra.mxu0 0
    %650 = vmatprep.subr.bf16.mxu0 0
    %651 = vmatpush1.bf16.msra.mxu0 0
    %652 = vmatprep.mubr.bf16.mxu0 0
    %653 = vmatmul.mubr.bf16.gmra.mrb[0].mxu0 %v230
    %v654 = vpop.f32.mrb[0].mxu0
    %v655 = vadd.f32 %v300, %v654
    %v656 = vpop.f32.mrb[0].mxu0
    %v657 = vadd.f32 %v304, %v656
    %v658 = vpop.f32.mrb[0].mxu0
    %v659 = vpop.f32.mrb[0].mxu0
    %660 = vdwg.mxu0
    %661 = vmatprep.subr.bf16.mxu0 %v511
    %662 = vmatpush1.bf16.msra.mxu0 %v510
    %663 = vmatprep.subr.bf16.mxu0 %v518
    %664 = vmatpush1.bf16.msra.mxu0 %v517
    %665 = vmatprep.subr.bf16.mxu0 %v525
    %666 = vmatpush1.bf16.msra.mxu0 %v524
    %667 = vmatprep.subr.bf16.mxu0 %v532
    %668 = vmatpush1.bf16.msra.mxu0 %v531
    %669 = vmatprep.subr.bf16.mxu0 %v539
    %670 = vmatpush1.bf16.msra.mxu0 %v538
    %671 = vmatprep.subr.bf16.mxu0 %v546
    %672 = vmatpush1.bf16.msra.mxu0 %v545
    %673 = vmatprep.subr.bf16.mxu0 %v553
    %674 = vmatpush1.bf16.msra.mxu0 %v552
    %675 = vmatprep.subr.bf16.mxu0 %v560
    %676 = vmatpush1.bf16.msra.mxu0 %v559
    %677 = vmatprep.subr.bf16.mxu0 0
    %678 = vmatpush1.bf16.msra.mxu0 0
    %679 = vmatprep.subr.bf16.mxu0 0
    %680 = vmatpush1.bf16.msra.mxu0 0
    %681 = vmatprep.subr.bf16.mxu0 0
    %682 = vmatpush1.bf16.msra.mxu0 0
    %683 = vmatprep.subr.bf16.mxu0 0
    %684 = vmatpush1.bf16.msra.mxu0 0
    %685 = vmatprep.subr.bf16.mxu0 0
    %686 = vmatpush1.bf16.msra.mxu0 0
    %687 = vmatprep.subr.bf16.mxu0 0
    %688 = vmatpush1.bf16.msra.mxu0 0
    %689 = vmatprep.subr.bf16.mxu0 0
    %690 = vmatpush1.bf16.msra.mxu0 0
    %691 = vmatprep.subr.bf16.mxu0 0
    %692 = vmatpush1.bf16.msra.mxu0 0
    %693 = vmatprep.mubr.bf16.mxu0 0
    %694 = vmatmul.mubr.bf16.gmra.mrb[0].mxu0 %v230
    %v695 = vpop.f32.mrb[0].mxu0
    %v696 = vadd.f32 %v308, %v695
    %v697 = vpop.f32.mrb[0].mxu0
    %v698 = vadd.f32 %v312, %v697
    %v699 = vpop.f32.mrb[0].mxu0
    %v700 = vpop.f32.mrb[0].mxu0
    %701 = vdwg.mxu0
    %702 = vmatprep.subr.bf16.mxu0 %v513
    %703 = vmatpush1.bf16.msra.mxu0 %v512
    %704 = vmatprep.subr.bf16.mxu0 %v520
    %705 = vmatpush1.bf16.msra.mxu0 %v519
    %706 = vmatprep.subr.bf16.mxu0 %v527
    %707 = vmatpush1.bf16.msra.mxu0 %v526
    %708 = vmatprep.subr.bf16.mxu0 %v534
    %709 = vmatpush1.bf16.msra.mxu0 %v533
    %710 = vmatprep.subr.bf16.mxu0 %v541
    %711 = vmatpush1.bf16.msra.mxu0 %v540
    %712 = vmatprep.subr.bf16.mxu0 %v548
    %713 = vmatpush1.bf16.msra.mxu0 %v547
    %714 = vmatprep.subr.bf16.mxu0 %v555
    %715 = vmatpush1.bf16.msra.mxu0 %v554
    %716 = vmatprep.subr.bf16.mxu0 %v562
    %717 = vmatpush1.bf16.msra.mxu0 %v561
    %718 = vmatprep.subr.bf16.mxu0 0
    %719 = vmatpush1.bf16.msra.mxu0 0
    %720 = vmatprep.subr.bf16.mxu0 0
    %721 = vmatpush1.bf16.msra.mxu0 0
    %722 = vmatprep.subr.bf16.mxu0 0
    %723 = vmatpush1.bf16.msra.mxu0 0
    %724 = vmatprep.subr.bf16.mxu0 0
    %725 = vmatpush1.bf16.msra.mxu0 0
    %726 = vmatprep.subr.bf16.mxu0 0
    %727 = vmatpush1.bf16.msra.mxu0 0
    %728 = vmatprep.subr.bf16.mxu0 0
    %729 = vmatpush1.bf16.msra.mxu0 0
    %730 = vmatprep.subr.bf16.mxu0 0
    %731 = vmatpush1.bf16.msra.mxu0 0
    %732 = vmatprep.subr.bf16.mxu0 0
    %733 = vmatpush1.bf16.msra.mxu0 0
    %734 = vmatprep.mubr.bf16.mxu0 0
    %735 = vmatmul.mubr.bf16.gmra.mrb[0].mxu0 %v230
    %v736 = vpop.f32.mrb[0].mxu0
    %v737 = vadd.f32 %v316, %v736
    %v738 = vpop.f32.mrb[0].mxu0
    %v739 = vadd.f32 %v320, %v738
    %v740 = vpop.f32.mrb[0].mxu0
    %v741 = vpop.f32.mrb[0].mxu0
    %742 = vdwg.mxu0
    %743 = vmatprep.subr.bf16.mxu0 0
    %744 = vmatpush1.bf16.msra.mxu0 %v514
    %745 = vmatprep.subr.bf16.mxu0 0
    %746 = vmatpush1.bf16.msra.mxu0 %v521
    %747 = vmatprep.subr.bf16.mxu0 0
    %748 = vmatpush1.bf16.msra.mxu0 %v528
    %749 = vmatprep.subr.bf16.mxu0 0
    %750 = vmatpush1.bf16.msra.mxu0 %v535
    %751 = vmatprep.subr.bf16.mxu0 0
    %752 = vmatpush1.bf16.msra.mxu0 %v542
    %753 = vmatprep.subr.bf16.mxu0 0
    %754 = vmatpush1.bf16.msra.mxu0 %v549
    %755 = vmatprep.subr.bf16.mxu0 0
    %756 = vmatpush1.bf16.msra.mxu0 %v556
    %757 = vmatprep.subr.bf16.mxu0 0
    %758 = vmatpush1.bf16.msra.mxu0 %v563
    %759 = vmatprep.subr.bf16.mxu0 0
    %760 = vmatpush1.bf16.msra.mxu0 0
    %761 = vmatprep.subr.bf16.mxu0 0
    %762 = vmatpush1.bf16.msra.mxu0 0
    %763 = vmatprep.subr.bf16.mxu0 0
    %764 = vmatpush1.bf16.msra.mxu0 0
    %765 = vmatprep.subr.bf16.mxu0 0
    %766 = vmatpush1.bf16.msra.mxu0 0
    %767 = vmatprep.subr.bf16.mxu0 0
    %768 = vmatpush1.bf16.msra.mxu0 0
    %769 = vmatprep.subr.bf16.mxu0 0
    %770 = vmatpush1.bf16.msra.mxu0 0
    %771 = vmatprep.subr.bf16.mxu0 0
    %772 = vmatpush1.bf16.msra.mxu0 0
    %773 = vmatprep.subr.bf16.mxu0 0
    %774 = vmatpush1.bf16.msra.mxu0 0
    %775 = vmatprep.mubr.bf16.mxu0 0
    %776 = vmatmul.mubr.bf16.gmra.mrb[0].mxu0 %v230
    %v777 = vpop.f32.mrb[0].mxu0
    %v778 = vadd.f32 %v324, %v777
    %v779 = vpop.f32.mrb[0].mxu0
    %v780 = vpop.f32.mrb[0].mxu0
    %v781 = vpop.f32.mrb[0].mxu0
    %782 = vdwg.mxu0
    %783 = vst [vmem:[%s7] sm:$0xff] %v655
    %784 = vst [vmem:[%s7 + $0x8] sm:$0xff] %v657
    %785 = vst [vmem:[%s7 + $0x10] sm:$0xff] %v696
    %786 = vst [vmem:[%s7 + $0x18] sm:$0xff] %v698
    %787 = vst [vmem:[%s7 + $0x20] sm:$0xff] %v737
    %788 = vst [vmem:[%s7 + $0x28] sm:$0xff] %v739
    %789 = vst [vmem:[%s7 + $0x30] sm:$0xff] %v778
    // Predicated region
    $region38: #{dqn_forward.1} parent=1 // pred_check
      _
    $region39: #{dqn_forward.1} parent=1 // pred_check_branch
      %791 = sbr.rel (0) target = $region41
    $region40: #{dqn_forward.1} parent=1 // pred_region
      _
    $region41: #{dqn_forward.1} parent=1 // pred_fallthru
      _
    // Predicated region
    $region42: #{dqn_forward.1} parent=1 // pred_check
      _
    $region43: #{dqn_forward.1} parent=1 // pred_check_branch
      %793 = sbr.rel (0) target = $region45
    $region44: #{dqn_forward.1} parent=1 // pred_region
      _
    $region45: #{dqn_forward.1} parent=1 // pred_fallthru
      _
    %794 = vsyncpa [#allocation3], 1
    %795 = vsyncpa [#allocation5], 1

</llo_original>
